<compile_context>
chip_gen: v7x
topology: tpu7x:2x2x1
jax: 0.10.0
libtpu: 0.0.40
codegen_flags: <defaults>
</compile_context>

<pallas_src>
import jax
import jax.numpy as jnp
from jax import lax
from jax.experimental import pallas as pl
from jax.experimental.pallas import tpu as pltpu


def _round_up(x, m):
    return ((x + m - 1) // m) * m


# -----------------------------------------------------------------------------
# Kernels
# -----------------------------------------------------------------------------

def _mm_bias_kernel_f32_out(x_ref, w_ref, b_ref, o_ref):
    """Accumulate straight into the f32 output tile; bias folded into k==0 init.

    x_ref: (tm, tk)   operand dtype (bf16 by default)
    w_ref: (tn, tk)   operand dtype, contracted on its last (K) dim
    b_ref: (1, tn)    f32
    o_ref: (tm, tn)   f32, resident across the K grid axis (block idx ignores k)
    """
    k = pl.program_id(3)

    @pl.when(k == 0)
    def _():
        o_ref[...] = jnp.broadcast_to(b_ref[...], o_ref.shape)

    # Contract both operands on their last (K) dim: the MXU consumes the
    # transposed-weight push directly, no materialized (tk, tn) copy.
    # TODO(synk): re-verify with pl.lower_as_mlir that Mosaic does not emit a
    # per-step vxpose of the (tn, tk) tile; if it ever does, pre-transpose the
    # weight to (B, K, O) once in _prep_params instead.
    o_ref[...] += lax.dot_general(
        x_ref[...], w_ref[...],
        dimension_numbers=(((1,), (1,)), ((), ())),
        preferred_element_type=jnp.float32,
    )


def _mm_bias_kernel_scratch(x_ref, w_ref, b_ref, o_ref, acc_ref):
    """f32 VMEM accumulator path, used when the output dtype is narrower than f32."""
    k = pl.program_id(3)

    @pl.when(k == 0)
    def _():
        acc_ref[...] = jnp.zeros_like(acc_ref)

    acc_ref[...] += lax.dot_general(
        x_ref[...], w_ref[...],
        dimension_numbers=(((1,), (1,)), ((), ())),
        preferred_element_type=jnp.float32,
    )

    @pl.when(k == pl.num_programs(3) - 1)
    def _():
        o_ref[...] = (acc_ref[...] + b_ref[...]).astype(o_ref.dtype)


# -----------------------------------------------------------------------------
# Tiling / parameter preparation
# -----------------------------------------------------------------------------

def _chip_config():
    """Per-generation tile defaults + explicit scoped-VMEM budget."""
    vmem_bytes = 128 << 20
    try:
        info = pltpu.get_tpu_info()
        vmem_bytes = int(getattr(info, "vmem_capacity_bytes", vmem_bytes))
    except Exception:
        pass
    if vmem_bytes <= (64 << 20):
        # v7x-class: 64 MiB VMEM per TensorCore, 3.2 TB/s HBM -> moderate tiles.
        return dict(tm=512, tn=512, tk=1024, vmem_limit=48 << 20)
    # v5e / v6e: 128 MiB VMEM, HBM-bound -> large output blocks cut re-reads.
    return dict(tm=1024, tn=1024, tk=1024, vmem_limit=96 << 20)


def _prep_params(weight, bias, tn_default, tk_default, op_dtype):
    """weight: (B, O, K), bias: (B, O) -> padded operand-dtype weight (B,Op,Kp),
    f32 bias (B,1,Op), chosen (tn, tk), and the unpadded O.  Done ONCE."""
    B, O, K = weight.shape
    tn = min(tn_default, _round_up(O, 128))
    tk = min(tk_default, _round_up(K, 128))
    Op, Kp = _round_up(O, tn), _round_up(K, tk)
    if (Op, Kp) != (O, K):
        weight = jnp.pad(weight, ((0, 0), (0, Op - O), (0, Kp - K)))
    if Op != O:
        bias = jnp.pad(bias, ((0, 0), (0, Op - O)))
    w_pad = weight.astype(op_dtype)                       # bf16 cast, hoisted
    b_pad = bias.astype(jnp.float32).reshape(B, 1, Op)    # bias stays f32
    return w_pad, b_pad, tn, tk, O


def _batched_linear(x, w_pad, b_pad, *, out_features, tm_default, tn, tk,
                    vmem_limit, out_dtype):
    """x: (B, M, K) unpadded; w_pad: (B, Op, Kp); b_pad: (B, 1, Op) f32."""
    B, Op, Kp = w_pad.shape
    Bx, M, K = x.shape
    assert Bx == B and K <= Kp

    op_dtype = w_pad.dtype
    itemsizes = (jnp.dtype(op_dtype).itemsize, jnp.dtype(out_dtype).itemsize)
    m_align = 8 if min(itemsizes) >= 4 else 16            # bf16 sublane packing

    tm = min(tm_default, _round_up(M, m_align))
    Mp = _round_up(M, tm)
    if (Mp, Kp) != (M, K):
        x = jnp.pad(x, ((0, 0), (0, Mp - M), (0, Kp - K)))
    x = x.astype(op_dtype)                                # bf16 cast at boundary

    if out_dtype == jnp.float32:
        kernel, scratch = _mm_bias_kernel_f32_out, []
    else:
        kernel = _mm_bias_kernel_scratch
        scratch = [pltpu.VMEM((tm, tn), jnp.float32)]

    out = pl.pallas_call(
        kernel,
        out_shape=jax.ShapeDtypeStruct((B, Mp, Op), out_dtype),
        grid_spec=pltpu.PrefetchScalarGridSpec(
            num_scalar_prefetch=0,
            grid=(B, Mp // tm, Op // tn, Kp // tk),       # reduction (K) last
            in_specs=[
                pl.BlockSpec((None, tm, tk), lambda bb, i, j, k: (bb, i, k)),
                pl.BlockSpec((None, tn, tk), lambda bb, i, j, k: (bb, j, k)),
                pl.BlockSpec((None, 1, tn), lambda bb, i, j, k: (bb, 0, j)),
            ],
            out_specs=pl.BlockSpec((None, tm, tn), lambda bb, i, j, k: (bb, i, j)),
            scratch_shapes=scratch,
        ),
        compiler_params=pltpu.CompilerParams(
            # TODO(synk): for v7x with B == 1 and a single M/O block, split M or
            # O so a parallel axis has extent >= 2 and both TensorCores get work.
            dimension_semantics=("parallel", "parallel", "parallel", "arbitrary"),
            vmem_limit_bytes=vmem_limit,
        ),
        # TODO(synk): if profiling shows exposed DMA on the K-inner loop at
        # large tiles, add pipeline_mode=pl.Buffered(3) to the x/w in_specs.
    )(x, w_pad, b_pad)

    return out[:, :M, :out_features]


# -----------------------------------------------------------------------------
# Module-style wrapper (parameter prep hoisted to construction)
# -----------------------------------------------------------------------------

class SurrogateLinearPallas:
    """JAX/Pallas equivalent of bayne's SurrogateLinear forward pass."""

    def __init__(self, weight, bias=None, *, use_bf16_operands=True):
        self.weight = weight
        self.bias = bias
        self.out_features = weight.shape[-2]

        cfg = _chip_config()
        self._tm_default = cfg["tm"]
        self._vmem_limit = cfg["vmem_limit"]
        tn_d, tk_d = cfg["tn"], cfg["tk"]

        op_dtype = (jnp.bfloat16
                    if use_bf16_operands and weight.dtype == jnp.float32
                    else weight.dtype)

        if weight.ndim == 2:
            O, K = weight.shape
            b = bias if bias is not None else jnp.zeros((O,), weight.dtype)
            self._plain = _prep_params(weight[None], b[None], tn_d, tk_d, op_dtype)
            self._batched = self._flat = None
        elif weight.ndim == 3:
            B, O, K = weight.shape
            b = bias if bias is not None else jnp.zeros((B, O), weight.dtype)
            # Per-batch form: used for 3-D inputs (true bmm).
            self._batched = _prep_params(weight, b, tn_d, tk_d, op_dtype)
            # Flattened (B*O, K) form: used for 2-D inputs broadcast across the
            # batch -> one big matmul instead of B tiny ones.
            self._flat = _prep_params(weight.reshape(1, B * O, K),
                                      b.reshape(1, B * O), tn_d, tk_d, op_dtype)
            self._plain = None
        else:
            raise ValueError("weight must be 2-D or 3-D")

    def __call__(self, x):
        out_dtype = x.dtype
        if self.weight.ndim == 2:
            O, K = self.weight.shape
            lead = x.shape[:-1]
            xm = x.reshape(1, -1, K)                 # fold leading dims into M
            out = self._run(xm, self._plain, out_dtype)
            return out.reshape(*lead, O)

        B, O, K = self.weight.shape
        if x.ndim == 2:
            # 2-D input broadcast across the weight batch: single matmul against
            # the flattened weight, unfold + transpose in the wrapper.
            N = x.shape[0]
            out = self._run(x[None], self._flat, out_dtype)[0]   # (N, B*O)
            return jnp.transpose(out.reshape(N, B, O), (1, 0, 2))
        return self._run(x, self._batched, out_dtype)

    def _run(self, x, params, out_dtype):
        w_pad, b_pad, tn, tk, out_features = params
        return _batched_linear(
            x, w_pad, b_pad, out_features=out_features,
            tm_default=self._tm_default, tn=tn, tk=tk,
            vmem_limit=self._vmem_limit, out_dtype=out_dtype)


def surrogate_linear(x, weight, bias=None, **kwargs):
    """One-shot functional form (re-pads params every call; prefer the class
    when the layer is applied repeatedly)."""
    return SurrogateLinearPallas(weight, bias, **kwargs)(x)


# -----------------------------------------------------------------------------
# Self-test
# -----------------------------------------------------------------------------

if __name__ == "__main__":
    key = jax.random.PRNGKey(0)
    k1, k2, k3, k4, k5, k6 = jax.random.split(key, 6)

    B, N, K, O = 3, 8, 32, 16  # weight batch, rows, in_features, out_features

    def as_bf16(a):  # reference uses the same bf16 operand rounding as the kernel
        return a.astype(jnp.bfloat16).astype(jnp.float32)

    # ---- batched weight (dim == 3), 2-D input broadcast across the batch ----
    weight3 = jax.random.normal(k1, (B, O, K), dtype=jnp.float32)
    bias3 = jax.random.normal(k2, (B, O), dtype=jnp.float32)
    x2d = jax.random.normal(k3, (N, K), dtype=jnp.float32)

    layer3 = SurrogateLinearPallas(weight3, bias3)
    out_b = jax.block_until_ready(layer3(x2d))
    ref_b = jnp.einsum("nk,bok->bno", as_bf16(x2d), as_bf16(weight3)) + bias3[:, None, :]
    assert out_b.shape == (B, N, O)
    assert out_b.dtype == x2d.dtype
    assert jnp.allclose(out_b, ref_b, atol=1e-3, rtol=1e-3)

    # ---- batched weight with matching 3-D input (true bmm) ----
    x3d = jax.random.normal(k6, (B, N, K), dtype=jnp.float32)
    out_b3 = jax.block_until_ready(layer3(x3d))
    ref_b3 = jnp.einsum("bnk,bok->bno", as_bf16(x3d), as_bf16(weight3)) + bias3[:, None, :]
    assert out_b3.shape == (B, N, O)
    assert jnp.allclose(out_b3, ref_b3, atol=1e-3, rtol=1e-3)

    # ---- plain linear (weight dim == 2), leading input dims folded into M ----
    weight2 = jax.random.normal(k4, (O, K), dtype=jnp.float32)
    bias2 = jax.random.normal(k5, (O,), dtype=jnp.float32)
    x = jax.random.normal(k6, (2, N, K), dtype=jnp.float32)

    layer2 = SurrogateLinearPallas(weight2, bias2)
    out_l = jax.block_until_ready(layer2(x))
    ref_l = as_bf16(x) @ as_bf16(weight2).T + bias2
    assert out_l.shape == (2, N, O)
    assert jnp.allclose(out_l, ref_l, atol=1e-3, rtol=1e-3)

    print("KERNEL_OK")
</pallas_src>

<mosaic_0001>
module attributes {stable_mosaic.version = 11 : i64} {
  func.func @_mm_bias_kernel_f32_out(%arg0: i32, %arg1: i32, %arg2: i32, %arg3: i32, %arg4: memref<1x16x128xbf16, #tpu.memory_space<vmem>>, %arg5: memref<1x128x128xbf16, #tpu.memory_space<vmem>>, %arg6: memref<1x1x128xf32, #tpu.memory_space<vmem>>, %arg7: memref<1x16x128xf32, #tpu.memory_space<vmem>>) attributes {dimension_semantics = [#tpu.dimension_semantics<parallel>, #tpu.dimension_semantics<parallel>, #tpu.dimension_semantics<parallel>, #tpu.dimension_semantics<arbitrary>], iteration_bounds = array<i64: 1, 1, 1, 1>, scalar_prefetch = 0 : i64, scratch_operands = 0 : i64, tpu.core_type = #tpu.core_type<tc>, window_params = [{transform_indices = @transform_0, window_bounds = array<i64: 1, 16, 128>}, {transform_indices = @transform_1, window_bounds = array<i64: 1, 128, 128>}, {transform_indices = @transform_2, window_bounds = array<i64: 1, 1, 128>}, {transform_indices = @transform_3, window_bounds = array<i64: 1, 16, 128>}]} {
    %c0_i32 = arith.constant 0 : i32
    %0 = arith.cmpi eq, %arg3, %c0_i32 : i32
    %1 = arith.extui %0 : i1 to i32
    %c0_i32_0 = arith.constant 0 : i32
    %2 = arith.cmpi ne, %1, %c0_i32_0 : i32
    scf.if %2 {
      %c0_12 = arith.constant 0 : index
      %c0_13 = arith.constant 0 : index
      %c0_14 = arith.constant 0 : index
      %14 = vector.load %arg6[%c0_12, %c0_13, %c0_14] : memref<1x1x128xf32, #tpu.memory_space<vmem>>, vector<1x1x128xf32>
      %15 = vector.shape_cast %14 : vector<1x1x128xf32> to vector<1x128xf32>
      %16 = vector.shape_cast %15 : vector<1x128xf32> to vector<1x128xf32>
      %17 = vector.broadcast %16 : vector<1x128xf32> to vector<16x128xf32>
      %c0_15 = arith.constant 0 : index
      %c0_16 = arith.constant 0 : index
      %c0_17 = arith.constant 0 : index
      %18 = vector.load %arg7[%c0_15, %c0_16, %c0_17] : memref<1x16x128xf32, #tpu.memory_space<vmem>>, vector<1x16x128xf32>
      %19 = vector.shape_cast %18 : vector<1x16x128xf32> to vector<16x128xf32>
      %20 = vector.shape_cast %17 : vector<16x128xf32> to vector<1x16x128xf32>
      tpu.vector_store %arg7[%c0_15, %c0_16, %c0_17], %20 {strides = array<i32>} : memref<1x16x128xf32, #tpu.memory_space<vmem>>, vector<1x16x128xf32>,
    } else {
    }
    %c0 = arith.constant 0 : index
    %c0_1 = arith.constant 0 : index
    %c0_2 = arith.constant 0 : index
    %3 = vector.load %arg7[%c0, %c0_1, %c0_2] : memref<1x16x128xf32, #tpu.memory_space<vmem>>, vector<1x16x128xf32>
    %4 = vector.shape_cast %3 : vector<1x16x128xf32> to vector<16x128xf32>
    %c0_3 = arith.constant 0 : index
    %c0_4 = arith.constant 0 : index
    %c0_5 = arith.constant 0 : index
    %5 = vector.load %arg4[%c0_3, %c0_4, %c0_5] : memref<1x16x128xbf16, #tpu.memory_space<vmem>>, vector<1x16x128xbf16>
    %6 = vector.shape_cast %5 : vector<1x16x128xbf16> to vector<16x128xbf16>
    %c0_6 = arith.constant 0 : index
    %c0_7 = arith.constant 0 : index
    %c0_8 = arith.constant 0 : index
    %7 = vector.load %arg5[%c0_6, %c0_7, %c0_8] : memref<1x128x128xbf16, #tpu.memory_space<vmem>>, vector<1x128x128xbf16>
    %8 = vector.shape_cast %7 : vector<1x128x128xbf16> to vector<128x128xbf16>
    %cst = arith.constant dense<0.000000e+00> : vector<16x128xf32>
    %9 = tpu.matmul %6, %8, %cst {dimension_numbers = #tpu.dot_dimension_numbers<[1], [1], [0], [0], [0, 0, 1, 0], [], []>} : vector<16x128xbf16>, vector<128x128xbf16>, vector<16x128xf32> -> vector<16x128xf32>
    %10 = arith.addf %4, %9 : vector<16x128xf32>
    %c0_9 = arith.constant 0 : index
    %c0_10 = arith.constant 0 : index
    %c0_11 = arith.constant 0 : index
    %11 = vector.load %arg7[%c0_9, %c0_10, %c0_11] : memref<1x16x128xf32, #tpu.memory_space<vmem>>, vector<1x16x128xf32>
    %12 = vector.shape_cast %11 : vector<1x16x128xf32> to vector<16x128xf32>
    %13 = vector.shape_cast %10 : vector<16x128xf32> to vector<1x16x128xf32>
    tpu.vector_store %arg7[%c0_9, %c0_10, %c0_11], %13 {strides = array<i32>} : memref<1x16x128xf32, #tpu.memory_space<vmem>>, vector<1x16x128xf32>,
    return
  }
  func.func @transform_0(%arg0: i32, %arg1: i32, %arg2: i32, %arg3: i32) -> (i32, i32, i32) {
    %c0_i32 = arith.constant 0 : i32
    return %arg0, %arg1, %arg3 : i32, i32, i32
  }
  func.func @transform_1(%arg0: i32, %arg1: i32, %arg2: i32, %arg3: i32) -> (i32, i32, i32) {
    %c0_i32 = arith.constant 0 : i32
    return %arg0, %arg2, %arg3 : i32, i32, i32
  }
  func.func @transform_2(%arg0: i32, %arg1: i32, %arg2: i32, %arg3: i32) -> (i32, i32, i32) {
    %c0_i32 = arith.constant 0 : i32
    %c0_i32_0 = arith.constant 0 : i32
    return %arg0, %c0_i32, %arg2 : i32, i32, i32
  }
  func.func @transform_3(%arg0: i32, %arg1: i32, %arg2: i32, %arg3: i32) -> (i32, i32, i32) {
    %c0_i32 = arith.constant 0 : i32
    return %arg0, %arg1, %arg2 : i32, i32, i32
  }
}

</mosaic_0001>

<llo_original>
// kernel: tpu_custom_call.1
$region0: #{tpu_custom_call.1}
  #allocation0 [shape = 'u32[]', space=smem, size = 0x4, offset = 0x4, fixed_abs, tag = 'smem constant byte address 0x4 - core index']
  #allocation1 [shape = 'u32[144,128]{1,0:T(1,128)}', space=vmem, size = 0x12000, scoped, tag = 'internal scratch']
  %s0 = inlined_call_operand.hbm [shape: bf16[1,16,128], index: 0, kind: input, shape index: {}]
  %s1 = inlined_call_operand.hbm [shape: bf16[1,128,128], index: 1, kind: input, shape index: {}]
  %s2 = inlined_call_operand.hbm [shape: f32[1,1,128], index: 2, kind: input, shape index: {}]
  %s3 = inlined_call_operand.hbm [shape: f32[1,16,128], index: 3, kind: output, shape index: {}]
  %s4 = sld [smem:[#allocation0]]
  $region38: #{tpu_custom_call.1} parent=0
    _
  %s6 = ssub.s32 1, %s4
  %s7 = scalar_select 0, %s6, %s4
  $region1: #{tpu_custom_call.1} parent=0
    #allocation2 [shape = 'u8[4096]{0}', space=vmem, size = 0x1000, scoped, tag = 'input window, operand 0, single buffered']
    #allocation3 [shape = 's32[1]{0}', space=sflag, size = 0x4, scoped, tag = 'scoped memory for tpu_custom_call.1']
    #allocation4 [shape = 's32[1]{0}', space=sflag, size = 0x4, scoped, tag = 'scoped memory for tpu_custom_call.1']
    #allocation5 [shape = 'u8[32768]{0}', space=vmem, size = 0x8000, scoped, tag = 'input window, operand 1, single buffered']
    #allocation6 [shape = 's32[1]{0}', space=sflag, size = 0x4, scoped, tag = 'scoped memory for tpu_custom_call.1']
    #allocation7 [shape = 'u8[512]{0}', space=vmem, size = 0x400, scoped, tag = 'input window, operand 2, single buffered']
    #allocation8 [shape = 'u8[8192]{0}', space=vmem, size = 0x2000, scoped, tag = 'output window, operand 0, single buffered']
    %8 = vsyncpa [#allocation3], 0
    %9 = vsyncpa [#allocation6], 0
    %10 = vsyncpa [#allocation4], 0
    // Predicated region
    $region2: #{tpu_custom_call.1} parent=1 // pred_check
      _
    $region3: #{tpu_custom_call.1} parent=1 // pred_check_branch
      %12 = sbr.rel (0) target = $region5
    $region4: #{tpu_custom_call.1} parent=1 // pred_region
      %s14 = ssub.s32 128, 128
      %15 = vsyncadd [#allocation3], %s14
      %s16 = sshll.u32 [#allocation2], 4
      %s17 = int_to_ptr.vmem [resolvable:$true] %s16
      %22 = dma.hbm_to_vmem [thread:$0]  %s0, 128, %s17, [#allocation3], 64, 64, 4
    $region5: #{tpu_custom_call.1} parent=1 // pred_fallthru
      _
    // Predicated region
    $region6: #{tpu_custom_call.1} parent=1 // pred_check
      _
    $region7: #{tpu_custom_call.1} parent=1 // pred_check_branch
      %24 = sbr.rel (0) target = $region9
    $region8: #{tpu_custom_call.1} parent=1 // pred_region
      %s26 = ssub.s32 1024, 1024
      %27 = vsyncadd [#allocation6], %s26
      %s28 = sshll.u32 [#allocation5], 4
      %s29 = int_to_ptr.vmem [resolvable:$true] %s28
      %34 = dma.hbm_to_vmem [thread:$0]  %s1, 1024, %s29, [#allocation6], 64, 64, 4
    $region9: #{tpu_custom_call.1} parent=1 // pred_fallthru
      _
    // Predicated region
    $region10: #{tpu_custom_call.1} parent=1 // pred_check
      _
    $region11: #{tpu_custom_call.1} parent=1 // pred_check_branch
      %36 = sbr.rel (0) target = $region13
    $region12: #{tpu_custom_call.1} parent=1 // pred_region
      %s38 = ssub.s32 16, 16
      %39 = vsyncadd [#allocation6], %s38
      %s41 = sshll.u32 [#allocation7], 4
      %s42 = int_to_ptr.vmem [resolvable:$true] %s41
      %44 = dma.hbm_to_vmem [thread:$0]  %s2, 16, %s42, [#allocation6]
    $region13: #{tpu_custom_call.1} parent=1 // pred_fallthru
      _
    // Predicated region
    $region14: #{tpu_custom_call.1} parent=1 // pred_check
      _
    $region15: #{tpu_custom_call.1} parent=1 // pred_check_branch
      %46 = sbr.rel (0) target = $region17
    $region16: #{tpu_custom_call.1} parent=1 // pred_region
      %47 = dma.done [#allocation3], 128
    $region17: #{tpu_custom_call.1} parent=1 // pred_fallthru
      _
    // Predicated region
    $region18: #{tpu_custom_call.1} parent=1 // pred_check
      _
    $region19: #{tpu_custom_call.1} parent=1 // pred_check_branch
      %49 = sbr.rel (0) target = $region21
    $region20: #{tpu_custom_call.1} parent=1 // pred_region
      %50 = dma.done [#allocation6], 1024
    $region21: #{tpu_custom_call.1} parent=1 // pred_fallthru
      _
    // Predicated region
    $region22: #{tpu_custom_call.1} parent=1 // pred_check
      _
    $region23: #{tpu_custom_call.1} parent=1 // pred_check_branch
      %52 = sbr.rel (0) target = $region25
    $region24: #{tpu_custom_call.1} parent=1 // pred_region
      %53 = dma.done [#allocation6], 16
    $region25: #{tpu_custom_call.1} parent=1 // pred_fallthru
      _
    %p55 = scmp.eq.s32.totalorder 0, 0
    // Predicated region
    $region26: #{tpu_custom_call.1} parent=1 // pred_check
      %p56 = pneg %p55
    $region27: #{tpu_custom_call.1} parent=1 // pred_check_branch
      %58 = sbr.rel (%p56) target = $region29
    $region28: #{tpu_custom_call.1} parent=1 // pred_region
      %v59 = vld [vmem:[#allocation7] sm:$0x1]
      %v61 = vlaneseq
      %v62 = vshrl.u32 %v61, 7
      %v63 = vsub.s32 0, %v62
      %v64 = vrot.slane %v59, %v63
      %66 = vst [vmem:[#allocation8] sm:$0xff] %v64
      %67 = vst [vmem:[#allocation8 + $0x8] sm:$0xff] %v64
    $region29: #{tpu_custom_call.1} parent=1 // pred_fallthru
      _
    %v68 = vld [vmem:[#allocation8] sm:$0xff]
    %v69 = vld [vmem:[#allocation8 + $0x8] sm:$0xff]
    %v70 = vld [vmem:[#allocation2] sm:$0xf]
    %v71 = vld [vmem:[#allocation2 + $0x4] sm:$0xf]
    %v72 = vld [vmem:[#allocation5] sm:$0xf]
    %v73 = vld [vmem:[#allocation5 + $0x4] sm:$0xf]
    %v74 = vld [vmem:[#allocation5 + $0x8] sm:$0xf]
    %v75 = vld [vmem:[#allocation5 + $0xc] sm:$0xf]
    %v76 = vld [vmem:[#allocation5 + $0x10] sm:$0xf]
    %v77 = vld [vmem:[#allocation5 + $0x14] sm:$0xf]
    %v78 = vld [vmem:[#allocation5 + $0x18] sm:$0xf]
    %v79 = vld [vmem:[#allocation5 + $0x1c] sm:$0xf]
    %v80 = vld [vmem:[#allocation5 + $0x20] sm:$0xf]
    %v81 = vld [vmem:[#allocation5 + $0x24] sm:$0xf]
    %v82 = vld [vmem:[#allocation5 + $0x28] sm:$0xf]
    %v83 = vld [vmem:[#allocation5 + $0x2c] sm:$0xf]
    %v84 = vld [vmem:[#allocation5 + $0x30] sm:$0xf]
    %v85 = vld [vmem:[#allocation5 + $0x34] sm:$0xf]
    %v86 = vld [vmem:[#allocation5 + $0x38] sm:$0xf]
    %v87 = vld [vmem:[#allocation5 + $0x3c] sm:$0xf]
    %v90 = vunpack.c.l.b16 %v70
    %v91 = vunpack.c.l.b16 %v71
    %v92 = vpack.c.b16 %v91, %v90
    %v110 = vunpack.c.l.b16 %v72
    %v111 = vunpack.c.l.b16 %v73
    %v112 = vunpack.c.l.b16 %v74
    %v113 = vunpack.c.l.b16 %v75
    %v114 = vunpack.c.l.b16 %v76
    %v115 = vunpack.c.l.b16 %v77
    %v116 = vunpack.c.l.b16 %v78
    %v117 = vunpack.c.l.b16 %v79
    %v118 = vunpack.c.l.b16 %v80
    %v119 = vunpack.c.l.b16 %v81
    %v120 = vunpack.c.l.b16 %v82
    %v121 = vunpack.c.l.b16 %v83
    %v122 = vunpack.c.l.b16 %v84
    %v123 = vunpack.c.l.b16 %v85
    %v124 = vunpack.c.l.b16 %v86
    %v125 = vunpack.c.l.b16 %v87
    %v126 = vpack.c.b16 %v111, %v110
    %v127 = vpack.c.b16 %v113, %v112
    %v128 = vpack.c.b16 %v115, %v114
    %v129 = vpack.c.b16 %v117, %v116
    %v130 = vpack.c.b16 %v119, %v118
    %v131 = vpack.c.b16 %v121, %v120
    %v132 = vpack.c.b16 %v123, %v122
    %v133 = vpack.c.b16 %v125, %v124
    %142 = vmatprep.subr.bf16.mxu0 0
    %143 = vmatpush1.bf16.xpose.msra.mxu0 %v126
    %144 = vmatprep.subr.bf16.mxu0 0
    %145 = vmatpush1.bf16.xpose.msra.mxu0 %v127
    %146 = vmatprep.subr.bf16.mxu0 0
    %147 = vmatpush1.bf16.xpose.msra.mxu0 %v128
    %148 = vmatprep.subr.bf16.mxu0 0
    %149 = vmatpush1.bf16.xpose.msra.mxu0 %v129
    %150 = vmatprep.subr.bf16.mxu0 0
    %151 = vmatpush1.bf16.xpose.msra.mxu0 %v130
    %152 = vmatprep.subr.bf16.mxu0 0
    %153 = vmatpush1.bf16.xpose.msra.mxu0 %v131
    %154 = vmatprep.subr.bf16.mxu0 0
    %155 = vmatpush1.bf16.xpose.msra.mxu0 %v132
    %156 = vmatprep.subr.bf16.mxu0 0
    %157 = vmatpush1.bf16.xpose.msra.mxu0 %v133
    %158 = vmatprep.subr.bf16.mxu0 0
    %159 = vmatpush1.bf16.xpose.msra.mxu0 0
    %160 = vmatprep.subr.bf16.mxu0 0
    %161 = vmatpush1.bf16.xpose.msra.mxu0 0
    %162 = vmatprep.subr.bf16.mxu0 0
    %163 = vmatpush1.bf16.xpose.msra.mxu0 0
    %164 = vmatprep.subr.bf16.mxu0 0
    %165 = vmatpush1.bf16.xpose.msra.mxu0 0
    %166 = vmatprep.subr.bf16.mxu0 0
    %167 = vmatpush1.bf16.xpose.msra.mxu0 0
    %168 = vmatprep.subr.bf16.mxu0 0
    %169 = vmatpush1.bf16.xpose.msra.mxu0 0
    %170 = vmatprep.subr.bf16.mxu0 0
    %171 = vmatpush1.bf16.xpose.msra.mxu0 0
    %172 = vmatprep.subr.bf16.mxu0 0
    %173 = vmatpush1.bf16.xpose.msra.mxu0 0
    %174 = vmatprep.mubr.bf16.mxu0 0
    %175 = vmatmul.mubr.bf16.gmra.mrb[0].mxu0 %v92
    %v176 = vpop.f32.mrb[0].mxu0
    %v177 = vadd.f32 0.0, %v176
    %v178 = vpop.f32.mrb[0].mxu0
    %v179 = vpop.f32.mrb[0].mxu0
    %v180 = vadd.f32 0.0, %v179
    %v181 = vpop.f32.mrb[0].mxu0
    %182 = vdwg.mxu0
    %v183 = vadd.f32 %v68, %v177
    %v184 = vadd.f32 %v69, %v180
    %185 = vst [vmem:[#allocation8] sm:$0xff] %v183
    %186 = vst [vmem:[#allocation8 + $0x8] sm:$0xff] %v184
    // Predicated region
    $region30: #{tpu_custom_call.1} parent=1 // pred_check
      _
    $region31: #{tpu_custom_call.1} parent=1 // pred_check_branch
      %188 = sbr.rel (0) target = $region33
    $region32: #{tpu_custom_call.1} parent=1 // pred_region
      %s190 = ssub.s32 256, 256
      %191 = vsyncadd [#allocation4], %s190
      %s192 = sshll.u32 [#allocation8], 4
      %s193 = int_to_ptr.vmem [resolvable:$true] %s192
      %198 = dma.vmem_to_hbm [thread:$0]  %s193, 256, %s3, [#allocation4], 128, 128, 8
    $region33: #{tpu_custom_call.1} parent=1 // pred_fallthru
      _
    // Predicated region
    $region34: #{tpu_custom_call.1} parent=1 // pred_check
      _
    $region35: #{tpu_custom_call.1} parent=1 // pred_check_branch
      %200 = sbr.rel (0) target = $region37
    $region36: #{tpu_custom_call.1} parent=1 // pred_region
      %201 = dma.done [#allocation4], 256
    $region37: #{tpu_custom_call.1} parent=1 // pred_fallthru
      _
    %202 = vsyncpa [#allocation3], 1
    %203 = vsyncpa [#allocation6], 1
    %204 = vsyncpa [#allocation4], 1

</llo_original>
